<compile_context>
chip_gen: v7x
topology: tpu7x:2x2x1
jax: 0.10.0
libtpu: 0.0.40
codegen_flags: <defaults>
</compile_context>

<pallas_src>
import functools

import jax
import jax.numpy as jnp
from jax.experimental import pallas as pl
from jax.experimental.pallas import tpu as pltpu


def _round_up(x, m):
    return ((x + m - 1) // m) * m


def _cdiv(a, b):
    return -(-a // b)


# ---------------------------------------------------------------------------
# Pallas kernels
# ---------------------------------------------------------------------------

def _focal_partial_kernel(logits_ref, labels_ref, out_ref, *, alpha, gamma,
                          num_classes, num_rows, tq):
    """Sigmoid focal loss, accumulated per layer across row tiles.

    logits_ref: [1, TQ, C]   (native dtype; upcast on load)
    labels_ref: [1, TQ, 1]   int32 target class per row (num_classes = no-obj)
    out_ref   : [1, 1, 128]  f32 per-layer running sum (resident across tiles)
    """
    r = pl.program_id(1)

    @pl.when(r == 0)
    def _():
        out_ref[...] = jnp.zeros_like(out_ref)

    x = logits_ref[...].astype(jnp.float32)             # [1, TQ, C]
    lbl = labels_ref[...]                                # [1, TQ, 1] int32
    C = x.shape[2]

    # Ragged-tail mask (no wrapper-side padding of the logits in HBM).
    row = jax.lax.broadcasted_iota(jnp.int32, x.shape, dimension=1)
    row_valid = (r * tq + row) < num_rows
    # Zero garbage tail rows BEFORE exp/log1p so stale-VMEM NaNs cannot leak.
    x = jnp.where(row_valid, x, 0.0)

    col = jax.lax.broadcasted_iota(jnp.int32, x.shape, dimension=2)
    is_pos = col == lbl
    valid = row_valid
    if num_classes < C:          # only guard when the head has extra columns
        col_valid = col < num_classes
        is_pos = jnp.logical_and(is_pos, col_valid)
        valid = jnp.logical_and(valid, col_valid)

    # One exp per element: e = exp(-|x|) feeds both stable BCE and sigmoid.
    e = jnp.exp(-jnp.abs(x))
    log1pe = jnp.log1p(e)
    ce = jnp.maximum(x, 0.0) - jnp.where(is_pos, x, 0.0) + log1pe
    if gamma == 2.0:
        inv = pl.reciprocal(1.0 + e, approx=True)        # EUP slot, ~free
    else:
        inv = 1.0 / (1.0 + e)                            # exact: q**gamma safe
    prob = jnp.where(x >= 0, inv, e * inv)               # sigmoid(x)

    p_t = jnp.where(is_pos, prob, 1.0 - prob)
    q = jnp.maximum(1.0 - p_t, 0.0)                      # approx recip guard
    mod = q * q if gamma == 2.0 else q ** gamma          # gamma=2 -> one vmul
    loss = ce * mod
    if alpha >= 0:
        loss = jnp.where(is_pos, alpha, 1.0 - alpha) * loss
    loss = jnp.where(valid, loss, 0.0)

    out_ref[...] += jnp.sum(loss)


def _box_loss_kernel(boxes_ref, mask_ref, l1_ref, giou_ref, *, eps):
    """L1 + GIoU loss sums per layer, coordinate-major layout.

    boxes_ref: [8, L, N] f32 -- leading axis 0-3 src (cx,cy,w,h), 4-7 tgt.
    mask_ref : [L, N] f32   -- 1.0 for valid matched columns.
    l1_ref, giou_ref: [L, 128] f32 -- per-layer sums broadcast across lanes.
    """
    # Leading-axis indexing -> free [L, N] views (no sublane slicing).
    scx, scy, sw, sh = boxes_ref[0], boxes_ref[1], boxes_ref[2], boxes_ref[3]
    tcx, tcy, tw, th = boxes_ref[4], boxes_ref[5], boxes_ref[6], boxes_ref[7]
    m = mask_ref[...]                                     # [L, N]

    l1 = (jnp.abs(scx - tcx) + jnp.abs(scy - tcy)
          + jnp.abs(sw - tw) + jnp.abs(sh - th))
    l1_sum = jnp.sum(l1 * m, axis=1, keepdims=True)       # [L, 1]

    sx0, sx1 = scx - 0.5 * sw, scx + 0.5 * sw
    sy0, sy1 = scy - 0.5 * sh, scy + 0.5 * sh
    tx0, tx1 = tcx - 0.5 * tw, tcx + 0.5 * tw
    ty0, ty1 = tcy - 0.5 * th, tcy + 0.5 * th

    area_s = (sx1 - sx0) * (sy1 - sy0)
    area_t = (tx1 - tx0) * (ty1 - ty0)
    inter = (jnp.maximum(jnp.minimum(sx1, tx1) - jnp.maximum(sx0, tx0), 0.0)
             * jnp.maximum(jnp.minimum(sy1, ty1) - jnp.maximum(sy0, ty0), 0.0))
    union = area_s + area_t - inter
    iou = inter / jnp.maximum(union, eps)
    enc = ((jnp.maximum(sx1, tx1) - jnp.minimum(sx0, tx0))
           * (jnp.maximum(sy1, ty1) - jnp.minimum(sy0, ty0)))
    giou = iou - (enc - union) / jnp.maximum(enc, eps)
    giou_sum = jnp.sum((1.0 - giou) * m, axis=1, keepdims=True)   # [L, 1]

    l1_ref[...] = jnp.broadcast_to(l1_sum, l1_ref.shape)
    giou_ref[...] = jnp.broadcast_to(giou_sum, giou_ref.shape)


# ---------------------------------------------------------------------------
# Pallas wrappers
# ---------------------------------------------------------------------------

def focal_loss_sums(logits, labels, *, num_classes, alpha, gamma=2.0):
    """Per-layer sigmoid-focal-loss sums.

    logits: [L, R, C] (native dtype, e.g. bf16), labels: [L, R] int32.
    Returns [L] f32 per-layer total sums (sum over all rows and classes).
    """
    L, R, C = logits.shape
    labels = labels.reshape(L, R, 1).astype(jnp.int32)

    c_pad = _round_up(C, 128)
    itemsize = logits.dtype.itemsize
    # Row tile: target ~1024 rows/step to amortize the ~0.35us fixed grid-step
    # overhead, capped so the double-buffered logits block stays <= ~8 MiB
    # (v5e scoped default is 16 MiB; v7x physical VMEM is 64 MiB).
    max_tq = max(8, ((8 << 20) // (2 * c_pad * itemsize)) // 8 * 8)
    target = min(1024, max_tq)
    ntiles = _cdiv(R, target)
    tq = min(_round_up(_cdiv(R, ntiles), 8), max_tq)
    ntiles = _cdiv(R, tq)

    elems = L * R * C
    bytes_in = L * R * C * itemsize + L * R * 4
    out = pl.pallas_call(
        functools.partial(_focal_partial_kernel, alpha=float(alpha),
                          gamma=float(gamma), num_classes=int(num_classes),
                          num_rows=int(R), tq=int(tq)),
        out_shape=jax.ShapeDtypeStruct((L, 1, 128), jnp.float32),
        grid=(L, ntiles),
        in_specs=[
            # Block last dim == full C (legal even when C % 128 != 0); avoids a
            # padded HBM copy of the logits.
            pl.BlockSpec((1, tq, C), lambda l, r: (l, r, 0)),
            pl.BlockSpec((1, tq, 1), lambda l, r: (l, r, 0)),
        ],
        # Per-layer accumulator: constant block index over the row-tile axis.
        out_specs=pl.BlockSpec((1, 1, 128), lambda l, r: (l, 0, 0)),
        compiler_params=pltpu.CompilerParams(
            dimension_semantics=("parallel", "arbitrary"),
            vmem_limit_bytes=32 * 1024 * 1024),
        cost_estimate=pl.CostEstimate(
            flops=16 * elems, transcendentals=3 * elems,
            bytes_accessed=bytes_in + L * 128 * 4),
    )(logits, labels)
    return out[:, 0, 0]                                   # [L]


def box_loss_sums(boxes, mask):
    """Per-layer L1 / GIoU loss sums.

    boxes: [8, L, N] f32 (coords 0-3 src, 4-7 tgt), mask: [L, N] f32.
    Returns (l1_sums [L], giou_sums [L]).
    """
    _, L, N = boxes.shape
    elems = L * N
    bytes_in = 8 * L * N * 4 + L * N * 4
    # TODO(synk): could be folded into the focal pallas_call (one launch less,
    # ~2-5us/step); kept as a separate tiny gridless launch for clarity.
    l1, giou = pl.pallas_call(
        functools.partial(_box_loss_kernel, eps=1e-7),
        out_shape=(jax.ShapeDtypeStruct((L, 128), jnp.float32),
                   jax.ShapeDtypeStruct((L, 128), jnp.float32)),
        in_specs=[pl.BlockSpec(memory_space=pltpu.MemorySpace.VMEM),
                  pl.BlockSpec(memory_space=pltpu.MemorySpace.VMEM)],
        out_specs=(pl.BlockSpec(memory_space=pltpu.MemorySpace.VMEM),
                   pl.BlockSpec(memory_space=pltpu.MemorySpace.VMEM)),
        cost_estimate=pl.CostEstimate(
            flops=60 * elems, transcendentals=0,
            bytes_accessed=bytes_in + 2 * L * 128 * 4),
    )(boxes, mask)
    return l1[:, 0], giou[:, 0]


# ---------------------------------------------------------------------------
# SetCriterion (JAX orchestration around the Pallas kernels)
# ---------------------------------------------------------------------------

def simple_matcher(outputs, targets, group_detr=1):
    # TODO(synk): Hungarian matching (scipy.linear_sum_assignment) has no clean
    # Pallas/TPU equivalent; use a deterministic identity assignment instead.
    indices = []
    for t in targets:
        n = int(t['labels'].shape[0])
        indices.append((jnp.arange(n, dtype=jnp.int32),
                        jnp.arange(n, dtype=jnp.int32)))
    return indices


class SetCriterionPallas:
    def __init__(self, num_classes, matcher, weight_dict, focal_alpha, losses,
                 group_detr=1, sum_group_losses=False, max_matches=128):
        # TODO(synk): ia_bce_loss / varifocal / position-supervised variants
        # are not implemented; only the default sigmoid-focal path.
        self.num_classes = num_classes
        self.matcher = matcher
        self.weight_dict = weight_dict
        self.focal_alpha = focal_alpha
        self.losses = losses
        self.group_detr = group_detr
        self.sum_group_losses = sum_group_losses
        self.max_matches = max_matches     # static capacity -> no recompiles

    # ---- helpers -----------------------------------------------------------
    def _get_src_permutation_idx(self, indices):
        batch_idx = jnp.concatenate(
            [jnp.full_like(src, i) for i, (src, _) in enumerate(indices)])
        src_idx = jnp.concatenate([src for src, _ in indices])
        return batch_idx, src_idx

    def _target_classes_all_layers(self, B, Q, targets, layer_indices):
        """Target classes for every layer with ONE batched scatter -> [L, B*Q]."""
        L = len(layer_indices)
        lay, bat, src, cls = [], [], [], []
        for li, indices in enumerate(layer_indices):
            b_idx, s_idx = self._get_src_permutation_idx(indices)
            tco = jnp.concatenate(
                [t['labels'][J] for t, (_, J) in zip(targets, indices)]
            ).astype(jnp.int32)
            lay.append(jnp.full_like(s_idx, li))
            bat.append(b_idx)
            src.append(s_idx)
            cls.append(tco)
        tc = jnp.full((L, B, Q), self.num_classes, jnp.int32)
        tc = tc.at[jnp.concatenate(lay), jnp.concatenate(bat),
                   jnp.concatenate(src)].set(jnp.concatenate(cls))
        return tc.reshape(L, B * Q)

    def _box_rows(self, pred_boxes, targets, indices, npad):
        batch_idx, src_idx = self._get_src_permutation_idx(indices)
        src = pred_boxes[batch_idx, src_idx].astype(jnp.float32)      # [n, 4]
        tgt = jnp.concatenate(
            [t['boxes'][j] for t, (_, j) in zip(targets, indices)],
            axis=0).astype(jnp.float32)
        n = src.shape[0]
        pad = jnp.broadcast_to(
            jnp.array([0.5, 0.5, 0.5, 0.5], jnp.float32), (npad - n, 4))
        src_p = jnp.concatenate([src, pad], axis=0)                   # [npad,4]
        tgt_p = jnp.concatenate([tgt, pad], axis=0)
        rows = jnp.concatenate([src_p, tgt_p], axis=1).T              # [8,npad]
        mask = (jnp.arange(npad) < n).astype(jnp.float32)             # [npad]
        return rows, mask

    def _cardinality(self, pred_logits, targets):
        # TODO(synk): assumes the last logit column is "no object" (logging only).
        tgt_lengths = jnp.asarray([t['labels'].shape[0] for t in targets],
                                  dtype=jnp.float32)
        card_pred = jnp.sum(
            jnp.argmax(pred_logits, axis=-1) != pred_logits.shape[-1] - 1,
            axis=1)
        return jnp.mean(jnp.abs(card_pred.astype(jnp.float32) - tgt_lengths))

    # ---- forward -----------------------------------------------------------
    def forward(self, outputs, targets, training=False):
        group_detr = self.group_detr if training else 1
        outputs_without_aux = {k: v for k, v in outputs.items()
                               if k not in ('aux_outputs', 'enc_outputs')}
        main_indices = self.matcher(outputs_without_aux, targets,
                                    group_detr=group_detr)

        num_boxes = sum(int(t['labels'].shape[0]) for t in targets)
        if not self.sum_group_losses:
            num_boxes = num_boxes * group_detr
        # TODO(synk): distributed all_reduce / get_world_size omitted.
        num_boxes = max(float(num_boxes), 1.0)

        # (suffix, layer_outputs, indices) for main + aux + enc layers.
        layers = [('', outputs_without_aux, main_indices)]
        if 'aux_outputs' in outputs:
            for i, aux in enumerate(outputs['aux_outputs']):
                layers.append((f'_{i}', aux,
                               self.matcher(aux, targets,
                                            group_detr=group_detr)))
        if 'enc_outputs' in outputs:
            enc = outputs['enc_outputs']
            layers.append(('_enc', enc,
                           self.matcher(enc, targets, group_detr=group_detr)))

        losses = {}

        # ---------------- classification (focal) loss: one launch -----------
        if 'labels' in self.losses:
            B, Q, C = outputs_without_aux['pred_logits'].shape
            # TODO(synk): if the model already exposes stacked [L,B,Q,C] logits,
            # feed them directly to skip this jnp.stack HBM copy.
            logits_l = jnp.stack(
                [lo['pred_logits'].reshape(B * Q, C) for _s, lo, _i in layers],
                axis=0)                                    # [L, B*Q, C]
            labels_l = self._target_classes_all_layers(
                B, Q, targets, [lidx for _s, _lo, lidx in layers])  # [L, B*Q]
            ce_sums = focal_loss_sums(logits_l, labels_l,
                                      num_classes=self.num_classes,
                                      alpha=self.focal_alpha, gamma=2.0)
            # sigmoid_focal_loss(...).mean(1).sum()/num_boxes * Q == sum/num_boxes
            for li, (suf, _lo, _lidx) in enumerate(layers):
                losses['loss_ce' + suf] = ce_sums[li] / num_boxes

            # class_error (log=True) only for the main layer.
            bidx, sidx = self._get_src_permutation_idx(main_indices)
            tco = jnp.concatenate(
                [t['labels'][J] for t, (_, J) in zip(targets, main_indices)])
            matched = outputs_without_aux['pred_logits'][bidx, sidx]
            pred = jnp.argmax(matched.astype(jnp.float32), axis=-1)
            acc = 100.0 * jnp.mean((pred == tco).astype(jnp.float32))
            losses['class_error'] = 100.0 - acc

        # ---------------- box (L1 + GIoU) loss: one launch -------------------
        if 'boxes' in self.losses:
            nmax = max(sum(int(s.shape[0]) for s, _ in lidx)
                       for _s, _lo, lidx in layers)
            npad = _round_up(max(nmax, self.max_matches, 1), 128)
            box_stack, mask_stack = [], []
            for _suf, lo, lidx in layers:
                rows, msk = self._box_rows(lo['pred_boxes'], targets, lidx,
                                           npad)
                box_stack.append(rows)
                mask_stack.append(msk)
            boxes_l = jnp.stack(box_stack, axis=1)          # [8, L, npad]
            masks_l = jnp.stack(mask_stack, axis=0)         # [L, npad]
            l1_sums, giou_sums = box_loss_sums(boxes_l, masks_l)
            for li, (suf, _lo, _lidx) in enumerate(layers):
                losses['loss_bbox' + suf] = l1_sums[li] / num_boxes
                losses['loss_giou' + suf] = giou_sums[li] / num_boxes

        # ---------------- cardinality (logging only, plain JAX) --------------
        if 'cardinality' in self.losses:
            for suf, lo, _lidx in layers:
                losses['cardinality_error' + suf] = self._cardinality(
                    lo['pred_logits'], targets)

        return losses


# ---------------------------------------------------------------------------
# Example / smoke test
# ---------------------------------------------------------------------------

if __name__ == "__main__":
    key = jax.random.PRNGKey(0)
    B, Q, C = 2, 8, 4  # batch, queries, classes
    ks = jax.random.split(key, 8)

    def make_layer_outputs(k):
        k1, k2 = jax.random.split(k)
        return {
            # native bf16 logits (upcast happens inside the kernel)
            'pred_logits': jax.random.normal(k1, (B, Q, C),
                                             jnp.float32).astype(jnp.bfloat16),
            'pred_boxes': jax.nn.sigmoid(
                jax.random.normal(k2, (B, Q, 4), jnp.float32)),
        }

    outputs = make_layer_outputs(ks[0])
    outputs['aux_outputs'] = [make_layer_outputs(ks[1]),
                              make_layer_outputs(ks[2])]
    outputs['enc_outputs'] = make_layer_outputs(ks[3])

    targets = [
        {'labels': jnp.array([0, 2, 1], jnp.int32),
         'boxes': jax.nn.sigmoid(jax.random.normal(ks[4], (3, 4), jnp.float32))},
        {'labels': jnp.array([3, 1], jnp.int32),
         'boxes': jax.nn.sigmoid(jax.random.normal(ks[5], (2, 4), jnp.float32))},
    ]

    criterion = SetCriterionPallas(
        num_classes=C,
        matcher=simple_matcher,
        weight_dict={'loss_ce': 1.0, 'loss_bbox': 5.0, 'loss_giou': 2.0},
        focal_alpha=0.25,
        losses=['labels', 'boxes', 'cardinality'],
    )

    losses = criterion.forward(outputs, targets)
    losses = jax.tree_util.tree_map(jax.block_until_ready, losses)
    for name, val in losses.items():
        assert bool(jnp.isfinite(val)), f"non-finite loss {name}"
    print("KERNEL_OK")
</pallas_src>

<mosaic_0001>
module attributes {stable_mosaic.version = 11 : i64} {
  func.func @_focal_partial_kernel(%arg0: i32, %arg1: i32, %arg2: memref<1x16x4xbf16, #tpu.memory_space<vmem>>, %arg3: memref<1x16x1xi32, #tpu.memory_space<vmem>>, %arg4: memref<1x1x128xf32, #tpu.memory_space<vmem>>) attributes {dimension_semantics = [#tpu.dimension_semantics<parallel>, #tpu.dimension_semantics<arbitrary>], iteration_bounds = array<i64: 4, 1>, scalar_prefetch = 0 : i64, scratch_operands = 0 : i64, tpu.core_type = #tpu.core_type<tc>, window_params = [{transform_indices = @transform_0, window_bounds = array<i64: 1, 16, 4>}, {transform_indices = @transform_1, window_bounds = array<i64: 1, 16, 1>}, {transform_indices = @transform_2, window_bounds = array<i64: 1, 1, 128>}]} {
    %c0_i32 = arith.constant 0 : i32
    %0 = arith.cmpi eq, %arg1, %c0_i32 : i32
    %1 = arith.extui %0 : i1 to i32
    %c0_i32_0 = arith.constant 0 : i32
    %2 = arith.cmpi ne, %1, %c0_i32_0 : i32
    scf.if %2 {
      %cst_25 = arith.constant 0.000000e+00 : f32
      %58 = vector.broadcast %cst_25 : f32 to vector<1x1x128xf32>
      %c0_26 = arith.constant 0 : index
      %c0_27 = arith.constant 0 : index
      %c0_28 = arith.constant 0 : index
      %59 = vector.load %arg4[%c0_26, %c0_27, %c0_28] : memref<1x1x128xf32, #tpu.memory_space<vmem>>, vector<1x1x128xf32>
      tpu.vector_store %arg4[%c0_26, %c0_27, %c0_28], %58 {strides = array<i32>} : memref<1x1x128xf32, #tpu.memory_space<vmem>>, vector<1x1x128xf32>,
    } else {
    }
    %c0 = arith.constant 0 : index
    %c0_1 = arith.constant 0 : index
    %c0_2 = arith.constant 0 : index
    %3 = vector.load %arg2[%c0, %c0_1, %c0_2] : memref<1x16x4xbf16, #tpu.memory_space<vmem>>, vector<1x16x4xbf16>
    %4 = arith.extf %3 : vector<1x16x4xbf16> to vector<1x16x4xf32>
    %c0_3 = arith.constant 0 : index
    %c0_4 = arith.constant 0 : index
    %c0_5 = arith.constant 0 : index
    %5 = vector.load %arg3[%c0_3, %c0_4, %c0_5] : memref<1x16x1xi32, #tpu.memory_space<vmem>>, vector<1x16x1xi32>
    %6 = tpu.iota {dimensions = array<i32: 1>} : vector<1x16x4xi32>
    %c16_i32 = arith.constant 16 : i32
    %7 = arith.muli %arg1, %c16_i32 : i32
    %8 = vector.broadcast %7 : i32 to vector<1x16x4xi32>
    %9 = arith.addi %8, %6 : vector<1x16x4xi32>
    %c16_i32_6 = arith.constant 16 : i32
    %10 = vector.broadcast %c16_i32_6 : i32 to vector<1x16x4xi32>
    %11 = arith.cmpi slt, %9, %10 : vector<1x16x4xi32>
    %cst = arith.constant 0.000000e+00 : f32
    %12 = vector.broadcast %cst : f32 to vector<1x16x4xf32>
    %13 = arith.select %11, %4, %12 : vector<1x16x4xi1>, vector<1x16x4xf32>
    %14 = tpu.iota {dimensions = array<i32: 2>} : vector<1x16x4xi32>
    %15 = vector.broadcast %5 : vector<1x16x1xi32> to vector<1x16x4xi32>
    %16 = arith.cmpi eq, %14, %15 : vector<1x16x4xi32>
    %17 = math.absf %13 : vector<1x16x4xf32>
    %cst_7 = arith.constant 0.000000e+00 : f32
    %18 = vector.broadcast %cst_7 : f32 to vector<1x16x4xf32>
    %19 = arith.subf %18, %17 : vector<1x16x4xf32>
    %20 = math.exp %19 : vector<1x16x4xf32>
    %21 = math.log1p %20 : vector<1x16x4xf32>
    %cst_8 = arith.constant 0.000000e+00 : f32
    %22 = vector.broadcast %cst_8 : f32 to vector<1x16x4xf32>
    %23 = arith.maximumf %13, %22 : vector<1x16x4xf32>
    %cst_9 = arith.constant 0.000000e+00 : f32
    %24 = vector.broadcast %cst_9 : f32 to vector<1x16x4xf32>
    %25 = arith.select %16, %13, %24 : vector<1x16x4xi1>, vector<1x16x4xf32>
    %26 = arith.subf %23, %25 : vector<1x16x4xf32>
    %27 = arith.addf %26, %21 : vector<1x16x4xf32>
    %cst_10 = arith.constant 1.000000e+00 : f32
    %28 = vector.broadcast %cst_10 : f32 to vector<1x16x4xf32>
    %29 = arith.addf %28, %20 : vector<1x16x4xf32>
    %30 = tpu.reciprocal %29 {approx = true} : vector<1x16x4xf32> -> vector<1x16x4xf32>
    %cst_11 = arith.constant 0.000000e+00 : f32
    %31 = vector.broadcast %cst_11 : f32 to vector<1x16x4xf32>
    %32 = arith.cmpf oge, %13, %31 : vector<1x16x4xf32>
    %33 = arith.mulf %20, %30 : vector<1x16x4xf32>
    %34 = arith.select %32, %30, %33 : vector<1x16x4xi1>, vector<1x16x4xf32>
    %cst_12 = arith.constant 1.000000e+00 : f32
    %35 = vector.broadcast %cst_12 : f32 to vector<1x16x4xf32>
    %36 = arith.subf %35, %34 : vector<1x16x4xf32>
    %37 = arith.select %16, %34, %36 : vector<1x16x4xi1>, vector<1x16x4xf32>
    %cst_13 = arith.constant 1.000000e+00 : f32
    %38 = vector.broadcast %cst_13 : f32 to vector<1x16x4xf32>
    %39 = arith.subf %38, %37 : vector<1x16x4xf32>
    %cst_14 = arith.constant 0.000000e+00 : f32
    %40 = vector.broadcast %cst_14 : f32 to vector<1x16x4xf32>
    %41 = arith.maximumf %39, %40 : vector<1x16x4xf32>
    %42 = arith.mulf %41, %41 : vector<1x16x4xf32>
    %43 = arith.mulf %27, %42 : vector<1x16x4xf32>
    %cst_15 = arith.constant 2.500000e-01 : f32
    %cst_16 = arith.constant 7.500000e-01 : f32
    %44 = vector.broadcast %cst_15 : f32 to vector<1x16x4xf32>
    %45 = vector.broadcast %cst_16 : f32 to vector<1x16x4xf32>
    %46 = arith.select %16, %44, %45 : vector<1x16x4xi1>, vector<1x16x4xf32>
    %47 = arith.mulf %46, %43 : vector<1x16x4xf32>
    %cst_17 = arith.constant 0.000000e+00 : f32
    %48 = vector.broadcast %cst_17 : f32 to vector<1x16x4xf32>
    %49 = arith.select %11, %47, %48 : vector<1x16x4xi1>, vector<1x16x4xf32>
    %c0_18 = arith.constant 0 : index
    %c0_19 = arith.constant 0 : index
    %c0_20 = arith.constant 0 : index
    %50 = vector.load %arg4[%c0_18, %c0_19, %c0_20] : memref<1x1x128xf32, #tpu.memory_space<vmem>>, vector<1x1x128xf32>
    %51 = vector.shape_cast %49 : vector<1x16x4xf32> to vector<1x1x16x4xf32>
    %cst_21 = arith.constant dense<0.000000e+00> : vector<1xf32>
    %52 = vector.multi_reduction <add>, %51, %cst_21 [1, 2, 3] : vector<1x1x16x4xf32> to vector<1xf32>
    %53 = vector.shape_cast %52 : vector<1xf32> to vector<1x1x1x1xf32>
    %54 = vector.extract %53[0, 0, 0, 0] : f32 from vector<1x1x1x1xf32>
    %55 = vector.broadcast %54 : f32 to vector<1x1x128xf32>
    %56 = arith.addf %50, %55 : vector<1x1x128xf32>
    %c0_22 = arith.constant 0 : index
    %c0_23 = arith.constant 0 : index
    %c0_24 = arith.constant 0 : index
    %57 = vector.load %arg4[%c0_22, %c0_23, %c0_24] : memref<1x1x128xf32, #tpu.memory_space<vmem>>, vector<1x1x128xf32>
    tpu.vector_store %arg4[%c0_22, %c0_23, %c0_24], %56 {strides = array<i32>} : memref<1x1x128xf32, #tpu.memory_space<vmem>>, vector<1x1x128xf32>,
    return
  }
  func.func @transform_0(%arg0: i32, %arg1: i32) -> (i32, i32, i32) {
    %c0_i32 = arith.constant 0 : i32
    %c0_i32_0 = arith.constant 0 : i32
    return %arg0, %arg1, %c0_i32 : i32, i32, i32
  }
  func.func @transform_1(%arg0: i32, %arg1: i32) -> (i32, i32, i32) {
    %c0_i32 = arith.constant 0 : i32
    %c0_i32_0 = arith.constant 0 : i32
    return %arg0, %arg1, %c0_i32 : i32, i32, i32
  }
  func.func @transform_2(%arg0: i32, %arg1: i32) -> (i32, i32, i32) {
    %c0_i32 = arith.constant 0 : i32
    %c0_i32_0 = arith.constant 0 : i32
    %c0_i32_1 = arith.constant 0 : i32
    return %arg0, %c0_i32, %c0_i32_0 : i32, i32, i32
  }
}

</mosaic_0001>

<llo_original>
// kernel: tpu_custom_call.1
$region0: #{tpu_custom_call.1}
  #allocation0 [shape = 'u32[]', space=smem, size = 0x4, offset = 0x4, fixed_abs, tag = 'smem constant byte address 0x4 - core index']
  #allocation1 [shape = 'u32[144,128]{1,0:T(1,128)}', space=vmem, size = 0x12000, scoped, tag = 'internal scratch']
  %s0 = inlined_call_operand.vmem [shape: bf16[4,16,4], index: 0, kind: input, shape index: {}]
  %s1 = inlined_call_operand.vmem [shape: s32[4,16,1], index: 1, kind: input, shape index: {}]
  %s2 = inlined_call_operand.hbm [shape: f32[4,1,128], index: 2, kind: output, shape index: {}]
  %s3 = sld [smem:[#allocation0]]
  $region45: #{tpu_custom_call.1} parent=0
    _
  %s5 = ssub.s32 1, %s3
  %s6 = scalar_select 0, %s5, %s3
  $region1: #{tpu_custom_call.1} parent=0
    #allocation2 [shape = 'u8[1024]{0}', space=vmem, size = 0x400, scoped, tag = 'output window, operand 0']
    #allocation3 [shape = 's32[2]{0}', space=sflag, size = 0x8, scoped, tag = 'scoped memory for tpu_custom_call.1']
    %7 = vsyncpa [#allocation3], 0
    %s8 = scalar_lea.sflag [#allocation3], 1
    %9 = vsyncpa %s8, 0
    loop: start=0, step=1, limit=6
    $region2: #{tpu_custom_call.1} parent=1 // loop_pre_header
      _
    $region3: #{tpu_custom_call.1} parent=1 // loop_header
      %s11 = sphi 0, %s15
      %p12 = scmp.ge.s32.totalorder %s11, 6
      %s18 = sphi 0, %s30
      %s19 = sphi 0, %s26
      %s20 = sphi 0, %s18
      %s21 = sphi 0, %s19
      %s22 = sphi 0, %s20
      %s23 = sphi 0, %s21
      %s35 = sphi 0, %s37
      %s38 = sphi 0, %s35
      %s39 = sphi 0, %s38
      %s55 = sphi 0, %s39
      %s63 = sphi 0, %s65
      %s66 = sphi 0, %s63
      %s67 = sphi 0, %s66
      %s83 = sphi 0, %s67
      %s89 = sphi 0, %s91
      %s92 = sphi 0, %s89
      %s93 = sphi 0, %s92
      %s109 = sphi 0, %s93
    $region4: #{tpu_custom_call.1} parent=1 // loop_header_branch
      %14 = sbr.rel (%p12) target = $region8
    $region5: #{tpu_custom_call.1} parent=1 // loop_body
      %s16 = ssub.s32 %s11, 1
      %s17 = ssub.s32 %s11, 2
      %s24 = sadd.s32 1, %s19
      %p25 = scmp.ge.s32.totalorder %s24, 1
      %s26 = scalar_select %p25, 0, %s24
      %s27 = sadd.s32 1, %s18
      %s28 = scalar_select %p25, %s27, %s18
      %p29 = scmp.ge.s32.totalorder %s28, 4
      %s30 = scalar_select %p29, 0, %s28
      %s31 = ssub.s32 %s18, %s30
      %s32 = ssub.s32 %s19, %s26
      %s33 = sor.u32 %s31, %s32
      %p34 = scmp.eq.s32.totalorder %s33, 0
      %s36 = sadd.s32 %s35, 1
      %s37 = scalar_select %p34, %s35, %s36
      %p40 = pneg %p34
      %p41 = scmp.eq.s32.totalorder %s11, 3
      %p42 = por %p40, %p41
      %p43 = scmp.ne.s32.totalorder %s35, %s38
      %p44 = scmp.eq.s32.totalorder %s11, 0
      %p45 = por %p43, %p44
      %p46 = scmp.ne.s32.totalorder %s35, %s38
      %p47 = scmp.eq.s32.totalorder %s16, 3
      %p48 = por %p46, %p47
      %p49 = scmp.ne.s32.totalorder %s38, %s39
      %p50 = scmp.eq.s32.totalorder %s16, 0
      %p51 = por %p49, %p50
      %p52 = scmp.ne.s32.totalorder %s38, %s39
      %p53 = scmp.eq.s32.totalorder %s17, 3
      %p54 = por %p52, %p53
      %p56 = scmp.ne.s32.totalorder %s39, %s55
      %p57 = scmp.eq.s32.totalorder %s17, 0
      %p58 = por %p56, %p57
      %s59 = ssub.s32 %s18, %s30
      %s60 = ssub.s32 %s19, %s26
      %s61 = sor.u32 %s59, %s60
      %p62 = scmp.eq.s32.totalorder %s61, 0
      %s64 = sadd.s32 %s63, 1
      %s65 = scalar_select %p62, %s63, %s64
      %p68 = pneg %p62
      %p69 = scmp.eq.s32.totalorder %s11, 3
      %p70 = por %p68, %p69
      %p71 = scmp.ne.s32.totalorder %s63, %s66
      %p72 = scmp.eq.s32.totalorder %s11, 0
      %p73 = por %p71, %p72
      %p74 = scmp.ne.s32.totalorder %s63, %s66
      %p75 = scmp.eq.s32.totalorder %s16, 3
      %p76 = por %p74, %p75
      %p77 = scmp.ne.s32.totalorder %s66, %s67
      %p78 = scmp.eq.s32.totalorder %s16, 0
      %p79 = por %p77, %p78
      %p80 = scmp.ne.s32.totalorder %s66, %s67
      %p81 = scmp.eq.s32.totalorder %s17, 3
      %p82 = por %p80, %p81
      %p84 = scmp.ne.s32.totalorder %s67, %s83
      %p85 = scmp.eq.s32.totalorder %s17, 0
      %p86 = por %p84, %p85
      %s87 = ssub.s32 %s18, %s30
      %p88 = scmp.eq.s32.totalorder %s87, 0
      %s90 = sadd.s32 %s89, 1
      %s91 = scalar_select %p88, %s89, %s90
      %p94 = pneg %p88
      %p95 = scmp.eq.s32.totalorder %s11, 3
      %p96 = por %p94, %p95
      %p97 = scmp.ne.s32.totalorder %s89, %s92
      %p98 = scmp.eq.s32.totalorder %s11, 0
      %p99 = por %p97, %p98
      %p100 = scmp.ne.s32.totalorder %s89, %s92
      %p101 = scmp.eq.s32.totalorder %s16, 3
      %p102 = por %p100, %p101
      %p103 = scmp.ne.s32.totalorder %s92, %s93
      %p104 = scmp.eq.s32.totalorder %s16, 0
      %p105 = por %p103, %p104
      %p106 = scmp.ne.s32.totalorder %s92, %s93
      %p107 = scmp.eq.s32.totalorder %s17, 3
      %p108 = por %p106, %p107
      %p110 = scmp.ne.s32.totalorder %s93, %s109
      %p111 = scmp.eq.s32.totalorder %s17, 0
      %p112 = por %p110, %p111
      %p113 = scmp.le.s32.totalorder 1, %s11
      %p114 = scmp.lt.s32.totalorder %s11, 5
      %p115 = pnand %p113, %p114
      %p116 = pneg %p115
      // Predicated region
      $region9: #{tpu_custom_call.1} parent=5 // pred_check
        _
      $region10: #{tpu_custom_call.1} parent=5 // pred_check_branch
        %118 = sbr.rel (%p115) target = $region12
      $region11: #{tpu_custom_call.1} parent=5 // pred_region
        %s119 = ssub.s32 %s11, 1
      $region12: #{tpu_custom_call.1} parent=5 // pred_fallthru
        _
      %p120 = scmp.lt.s32.totalorder %s11, 4
      // Predicated region
      $region13: #{tpu_custom_call.1} parent=5 // pred_check
        %p121 = pneg %p120
      $region14: #{tpu_custom_call.1} parent=5 // pred_check_branch
        %123 = sbr.rel (%p121) target = $region16
      $region15: #{tpu_custom_call.1} parent=5 // pred_region
        // Predicated region
        $region17: #{tpu_custom_call.1} parent=15 // pred_check
          %p124 = pneg %p45
        $region18: #{tpu_custom_call.1} parent=15 // pred_check_branch
          %126 = sbr.rel (%p124) target = $region20
        $region19: #{tpu_custom_call.1} parent=15 // pred_region
          %s127 = smul.u32 2, %s19
          %p128 = scmp.lt.s32.totalorder %s18, 3
          %s129 = scalar_select %p128, %s18, 3
          %p130 = scmp.lt.s32.totalorder %s127, 1
          %s131 = scalar_select %p130, %s127, 1
          %s132 = smul.addr %s129, 2
          %s133 = sadd.s32 %s131, %s132
          %s134 = smul.addr %s133, 4
          %s135 = scalar_lea.vmem %s0, %s134
          %s136 = smul.u32 2, %s19
        $region20: #{tpu_custom_call.1} parent=15 // pred_fallthru
          _
        // Predicated region
        $region21: #{tpu_custom_call.1} parent=15 // pred_check
          %p137 = pneg %p73
        $region22: #{tpu_custom_call.1} parent=15 // pred_check_branch
          %139 = sbr.rel (%p137) target = $region24
        $region23: #{tpu_custom_call.1} parent=15 // pred_region
          %s140 = smul.u32 2, %s19
          %p141 = scmp.lt.s32.totalorder %s18, 3
          %s142 = scalar_select %p141, %s18, 3
          %p143 = scmp.lt.s32.totalorder %s140, 1
          %s144 = scalar_select %p143, %s140, 1
          %s145 = smul.addr %s142, 2
          %s146 = sadd.s32 %s144, %s145
          %s147 = smul.addr %s146, 8
          %s148 = scalar_lea.vmem %s1, %s147
          %s149 = smul.u32 2, %s19
        $region24: #{tpu_custom_call.1} parent=15 // pred_fallthru
          _
      $region16: #{tpu_custom_call.1} parent=5 // pred_fallthru
        _
      %p150 = scmp.le.s32.totalorder 1, %s11
      %p151 = scmp.lt.s32.totalorder %s11, 5
      %p152 = pnand %p150, %p151
      %p153 = pneg %p152
      // Predicated region
      $region25: #{tpu_custom_call.1} parent=5 // pred_check
        _
      $region26: #{tpu_custom_call.1} parent=5 // pred_check_branch
        %155 = sbr.rel (%p152) target = $region28
      $region27: #{tpu_custom_call.1} parent=5 // pred_region
        %s156 = ssub.s32 %s11, 1
        %s157 = smul.u32 2, %s21
        %p158 = scmp.lt.s32.totalorder %s20, 3
        %s159 = scalar_select %p158, %s20, 3
        %p160 = scmp.lt.s32.totalorder %s157, 1
        %s161 = scalar_select %p160, %s157, 1
        %s162 = smul.addr %s159, 2
        %s163 = sadd.s32 %s161, %s162
        %s164 = smul.addr %s163, 4
        %s165 = scalar_lea.vmem %s0, %s164
        %p166 = pneg %p51
        %p167 = pneg %p48
        %s168 = smul.u32 2, %s21
        %p169 = scmp.lt.s32.totalorder %s20, 3
        %s170 = scalar_select %p169, %s20, 3
        %p171 = scmp.lt.s32.totalorder %s168, 1
        %s172 = scalar_select %p171, %s168, 1
        %s173 = smul.addr %s170, 2
        %s174 = sadd.s32 %s172, %s173
        %s175 = smul.addr %s174, 8
        %s176 = scalar_lea.vmem %s1, %s175
        %p177 = pneg %p79
        %p178 = pneg %p76
        %p179 = pneg %p105
        %p180 = pneg %p102
        %s181 = sand.u32 %s92, 1
        %s182 = scalar_lea.sflag [#allocation3], %s181
        %s183 = sand.u32 %s92, 1
        %s184 = scalar_lea.vmem [#allocation2], %s183
        %s185 = smul.u32 2, %s21
        %p186 = scmp.lt.s32.totalorder %s20, 3
        %s187 = scalar_select %p186, %s20, 3
        %p188 = scmp.lt.s32.totalorder %s185, 1
        %s189 = scalar_select %p188, %s185, 1
        %s190 = smul.addr %s187, 2
        %s191 = sadd.s32 %s189, %s190
        %s192 = smul.addr %s191, 4
        %s193 = scalar_lea.vmem %s0, %s192
        %s194 = smul.u32 2, %s21
        %s195 = smul.u32 2, %s21
        %p196 = scmp.lt.s32.totalorder %s20, 3
        %s197 = scalar_select %p196, %s20, 3
        %p198 = scmp.lt.s32.totalorder %s195, 1
        %s199 = scalar_select %p198, %s195, 1
        %s200 = smul.addr %s197, 2
        %s201 = sadd.s32 %s199, %s200
        %s202 = smul.addr %s201, 8
        %s203 = scalar_lea.vmem %s1, %s202
        %s204 = smul.u32 2, %s21
        %p205 = scmp.eq.s32.totalorder %s21, 0
        // Predicated region
        $region29: #{tpu_custom_call.1} parent=27 // pred_check
          %p206 = pneg %p205
        $region30: #{tpu_custom_call.1} parent=27 // pred_check_branch
          %208 = sbr.rel (%p206) target = $region32
        $region31: #{tpu_custom_call.1} parent=27 // pred_region
          %209 = vst [vmem:[%s184] sm:$0x1] 0.0
        $region32: #{tpu_custom_call.1} parent=27 // pred_fallthru
          _
        %v210 = vld [vmem:[%s193] sm:$0xf]
        %v211 = vld [vmem:[%s193 + $0x4] sm:$0xf]
        %v212 = vunpack.c.l.bf16 %v210
        %v213 = vunpack.c.l.bf16 %v211
        %v214 = vld [vmem:[%s203] sm:$0xff]
        %v215 = vld [vmem:[%s203 + $0x8] sm:$0xff]
        %v216 = vlaneseq
        %v217 = vshrl.u32 %v216, 7
        %v218 = vadd.s32 %v217, 8
        %s219 = smul.u32 %s21, 16
        %v220 = vstv %s219
        %v221 = vadd.s32 %v220, %v217
        %v222 = vadd.s32 %v220, %v218
        %vm223 = vcmp.lt.s32.totalorder %v221, 16
        %vm224 = vcmp.lt.s32.totalorder %v222, 16
        %v225 = vsel %vm223, %v212, 0.0
        %v226 = vsel %vm224, %v213, 0.0
        %v227 = vlaneseq
        %v228 = vand.u32 %v227, 127
        %229 = vset.pattern.permute.xlu0 0
        %230 = vperm.xlu0 %229, %v214
        %v231 = vpop.permute.xlu0 %230
        %232 = vset.pattern.permute.xlu0 0
        %233 = vperm.xlu0 %232, %v215
        %v234 = vpop.permute.xlu0 %233
        %vm235 = vcmp.eq.s32.totalorder %v228, %v231
        %vm236 = vcmp.eq.s32.totalorder %v228, %v234
        %v237 = vand.u32 2147483647, %v225
        %v238 = vand.u32 2147483647, %v226
        %v239 = vsub.f32 0.0, %v237
        %v240 = vsub.f32 0.0, %v238
        %v241 = vmul.f32 %v239, 1.442695
        %v242 = vpow.pop %v241
        %v243 = vmul.f32 %v240, 1.442695
        %v244 = vpow.pop %v243
        %v245 = vadd.f32 %v242, 1.0
        %v246 = vlog2.pop %v245
        %v247 = vmul.f32 %v246, 0.6931472
        %v248 = vmul.f32 -0.5, %v242
        %v249 = vadd.f32 %v248, 1.0
        %v250 = vmul.f32 %v249, %v242
        %v251 = vand.u32 2147483647, %v242
        %vm252 = vcmp.lt.f32.partialorder %v251, 0.0004427343
        %v253 = vsel %vm252, %v250, %v247
        %v254 = vadd.f32 %v244, 1.0
        %v255 = vlog2.pop %v254
        %v256 = vmul.f32 %v255, 0.6931472
        %v257 = vmul.f32 -0.5, %v244
        %v258 = vadd.f32 %v257, 1.0
        %v259 = vmul.f32 %v258, %v244
        %v260 = vand.u32 2147483647, %v244
        %vm261 = vcmp.lt.f32.partialorder %v260, 0.0004427343
        %v262 = vsel %vm261, %v259, %v256
        %v263 = vmax.f32 %v225, 0.0
        %v264 = vmax.f32 %v226, 0.0
        %v265 = vsel %vm235, %v225, 0.0
        %v266 = vsel %vm236, %v226, 0.0
        %v267 = vsub.f32 %v263, %v265
        %v268 = vsub.f32 %v264, %v266
        %v269 = vadd.f32 %v267, %v253
        %v270 = vadd.f32 %v268, %v262
        %v271 = vadd.f32 %v242, 1.0
        %v272 = vadd.f32 %v244, 1.0
        %v273 = vrcp.pop %v271
        %v274 = vrcp.pop %v272
        %vm275 = vcmp.ge.f32.partialorder %v225, 0.0
        %vm276 = vcmp.ge.f32.partialorder %v226, 0.0
        %v277 = vmul.f32 %v242, %v273
        %v278 = vmul.f32 %v244, %v274
        %v279 = vsel %vm275, %v273, %v277
        %v280 = vsel %vm276, %v274, %v278
        %v281 = vsub.f32 1.0, %v279
        %v282 = vsub.f32 1.0, %v280
        %v283 = vsel %vm235, %v279, %v281
        %v284 = vsel %vm236, %v280, %v282
        %v285 = vsub.f32 1.0, %v283
        %v286 = vsub.f32 1.0, %v284
        %v287 = vmax.f32 %v285, 0.0
        %v288 = vmax.f32 %v286, 0.0
        %v289 = vmul.f32 %v287, %v287
        %v290 = vmul.f32 %v288, %v288
        %v291 = vmul.f32 %v269, %v289
        %v292 = vmul.f32 %v270, %v290
        %v293 = vsel %vm235, 0.25, 0.75
        %v294 = vsel %vm236, 0.25, 0.75
        %v295 = vmul.f32 %v293, %v291
        %v296 = vmul.f32 %v294, %v292
        %v297 = vsel %vm223, %v295, 0.0
        %v298 = vsel %vm224, %v296, 0.0
        %v299 = vld [vmem:[%s184] sm:$0x1]
        %vm300 = vcmask 31744
        %v301 = vsel %vm300, %v297, 0.0
        %v302 = vsel %vm300, %v298, 0.0
        %v303 = vadd.f32 %v301, %v302
        %304 = vadd.xlane.f32.xlu0 %v303
        %v305 = vpop.xlane.xlu0 %304
        %v306 = vrot.slane %v305, 4
        %v307 = vadd.f32 %v305, %v306
        %v308 = vrot.slane %v307, 2
        %v309 = vadd.f32 %v307, %v308
        %v310 = vrot.slane %v309, 1
        %v311 = vadd.f32 %v309, %v310
        %s312 = vtos %v311
        %v313 = vstv %s312
        %v314 = vadd.f32 %v299, %v313
        %315 = vst [vmem:[%s184] sm:$0x1] %v314
        %s316 = sand.u32 %s92, 1
        %s317 = scalar_lea.sflag [#allocation3], %s316
        %s318 = sand.u32 %s92, 1
        %s319 = scalar_lea.vmem [#allocation2], %s318
        // Predicated region
        $region33: #{tpu_custom_call.1} parent=27 // pred_check
          %p320 = pneg %p102
        $region34: #{tpu_custom_call.1} parent=27 // pred_check_branch
          %322 = sbr.rel (%p320) target = $region36
        $region35: #{tpu_custom_call.1} parent=27 // pred_region
          %s324 = ssub.s32 16, 16
          %325 = vsyncadd %s317, %s324
          %s326 = smul.addr %s20, 16
          %s327 = scalar_lea.hbm %s2, %s326
          %s329 = sshll.u32 %s319, 4
          %s330 = int_to_ptr.vmem [resolvable:$true] %s329
          %332 = dma.vmem_to_hbm [thread:$0]  %s330, 16, %s327, %s317
        $region36: #{tpu_custom_call.1} parent=27 // pred_fallthru
          _
      $region28: #{tpu_custom_call.1} parent=5 // pred_fallthru
        _
      %p333 = scmp.le.s32.totalorder 2, %s11
      // Predicated region
      $region37: #{tpu_custom_call.1} parent=5 // pred_check
        %p334 = pneg %p333
      $region38: #{tpu_custom_call.1} parent=5 // pred_check_branch
        %336 = sbr.rel (%p334) target = $region40
      $region39: #{tpu_custom_call.1} parent=5 // pred_region
        %s337 = ssub.s32 %s11, 2
        // Predicated region
        $region41: #{tpu_custom_call.1} parent=39 // pred_check
          %p338 = pneg %p108
        $region42: #{tpu_custom_call.1} parent=39 // pred_check_branch
          %340 = sbr.rel (%p338) target = $region44
        $region43: #{tpu_custom_call.1} parent=39 // pred_region
          %s341 = sand.u32 %s93, 1
          %s342 = scalar_lea.sflag [#allocation3], %s341
          %s343 = sand.u32 %s93, 1
          %s344 = scalar_lea.vmem [#allocation2], %s343
          %345 = dma.done %s342, 16
        $region44: #{tpu_custom_call.1} parent=39 // pred_fallthru
          _
      $region40: #{tpu_custom_call.1} parent=5 // pred_fallthru
        _
    $region6: #{tpu_custom_call.1} parent=1 // loop_footer
      %s15 = sadd.s32 1, %s11
    $region7: #{tpu_custom_call.1} parent=1 // loop_footer_branch
      %10 = sbr.rel target = $region3
    $region8: #{tpu_custom_call.1} parent=1 // loop_exit
      _
    %346 = vsyncpa [#allocation3], 1
    %s347 = scalar_lea.sflag [#allocation3], 1
    %348 = vsyncpa %s347, 1

</llo_original>
